<compile_context>
chip_gen: v7x
topology: tpu7x:2x2x1
jax: 0.10.0
libtpu: 0.0.40
codegen_flags: <defaults>
</compile_context>

<pallas_src>
import jax
import jax.numpy as jnp
from jax import lax
from jax.experimental import pallas as pl
from jax.experimental.pallas import tpu as pltpu

# Small test sizes consistent with the module (PyTorch defaults: hidden=768,
# intermediate 256, num_classes=5). H kept at 128 lanes for the toy run.
B, S, H, MID, C = 2, 8, 128, 256, 5
VOCAB, NSEG = 100, 2
BT = 8          # batch rows per grid step (sublane-aligned tile)
C_PAD = 128     # lane-dense padded class dim


def bert_classifier_kernel(vlen_ref,            # SMEM scalar prefetch: (B_pad,) int32
                           emb_ref,             # (BT, S, H)  f32
                           wp_ref, bp_ref,      # (H, H) bf16, (1, H) f32
                           w12_ref, b12_ref,    # (H, C_PAD) f32, (1, C_PAD) f32
                           out_ref):            # (BT, C_PAD) f32
    i = pl.program_id(0)
    emb = emb_ref[...]

    # gen_attention_mask: mask[b, s] = 1.0 iff s < valid_length[b].
    # valid_length is read as SMEM scalars (scalar path, no vector load).
    pos = lax.broadcasted_iota(jnp.int32, (1, S), 1)
    rows = []
    for r in range(BT):
        v = jnp.maximum(vlen_ref[i * BT + r], 1)         # clamp -> no 0/0 on pad rows
        rows.append((pos < v).astype(jnp.float32))
    mask = jnp.concatenate(rows, axis=0)                 # (BT, S)

    # Synthetic BERT pooler: masked mean over sequence -> dense -> tanh.
    denom = jnp.sum(mask, axis=1, keepdims=True)         # (BT, 1), >= 1
    inv = pl.reciprocal(denom, approx=False)             # exact reciprocal, once
    mean = jnp.sum(emb * mask[:, :, None], axis=1) * inv  # (BT, H)
    pooled = jnp.tanh(
        jnp.dot(mean, wp_ref[...].astype(jnp.float32),
                preferred_element_type=jnp.float32) + bp_ref[...])   # (BT, H)

    # Folded classifier: x @ (w1 @ w2) + (b1 @ w2 + b2), lane-dense padded to 128.
    out_ref[...] = (jnp.dot(pooled, w12_ref[...],
                            preferred_element_type=jnp.float32) + b12_ref[...])


def bert_classifier_forward(token_ids, valid_length, segment_ids, params):
    # Embedding gather stays in plain JAX glue; everything else is in-kernel.
    emb = (jnp.take(params["tok_emb"], token_ids, axis=0)
           + jnp.take(params["seg_emb"], segment_ids, axis=0)).astype(jnp.float32)

    # Fold the two classifier Linears (valid: no nonlinearity / dropout between them).
    w12 = jnp.dot(params["w1"], params["w2"])                        # (H, C)
    b12 = jnp.dot(params["b1"], params["w2"]) + params["b2"]         # (1, C)
    w12 = jnp.pad(w12, ((0, 0), (0, C_PAD - C)))                     # (H, 128)
    b12 = jnp.pad(b12, ((0, 0), (0, C_PAD - C)))                     # (1, 128)

    # Pad batch to the BT tile; pad rows get valid_length=1 and are sliced off below.
    b = token_ids.shape[0]
    b_pad = ((b + BT - 1) // BT) * BT
    emb = jnp.pad(emb, ((0, b_pad - b), (0, 0), (0, 0)))
    vlen = jnp.pad(valid_length.astype(jnp.int32), (0, b_pad - b), constant_values=1)

    out = pl.pallas_call(
        bert_classifier_kernel,
        out_shape=jax.ShapeDtypeStruct((b_pad, C_PAD), jnp.float32),
        grid_spec=pltpu.PrefetchScalarGridSpec(
            num_scalar_prefetch=1,
            grid=(b_pad // BT,),
            in_specs=[
                pl.BlockSpec((BT, S, H), lambda i, v_ref: (i, 0, 0)),   # emb tile
                pl.BlockSpec((H, H), lambda i, v_ref: (0, 0)),          # w_pool (bf16)
                pl.BlockSpec((1, H), lambda i, v_ref: (0, 0)),          # b_pool
                pl.BlockSpec((H, C_PAD), lambda i, v_ref: (0, 0)),      # folded W12
                pl.BlockSpec((1, C_PAD), lambda i, v_ref: (0, 0)),      # folded b12
            ],
            out_specs=pl.BlockSpec((BT, C_PAD), lambda i, v_ref: (i, 0)),
        ),
        compiler_params=pltpu.CompilerParams(
            dimension_semantics=("parallel",)),
    )(vlen, emb, params["w_pool"], params["b_pool"], w12, b12)

    return out[:b, :C]


def reference_forward(token_ids, valid_length, segment_ids, params):
    emb = (jnp.take(params["tok_emb"], token_ids, axis=0)
           + jnp.take(params["seg_emb"], segment_ids, axis=0))
    mask = (jnp.arange(S)[None, :] < valid_length[:, None]).astype(jnp.float32)
    mean = jnp.sum(emb * mask[:, :, None], axis=1) / jnp.sum(mask, 1, keepdims=True)
    pooled = jnp.tanh(mean @ params["w_pool"].astype(jnp.float32) + params["b_pool"])
    hid = pooled @ params["w1"] + params["b1"]
    return hid @ params["w2"] + params["b2"]


def init_params(key):
    ks = jax.random.split(key, 6)
    scale = 0.02
    return {
        "tok_emb": scale * jax.random.normal(ks[0], (VOCAB, H), jnp.float32),
        "seg_emb": scale * jax.random.normal(ks[1], (NSEG, H), jnp.float32),
        # pooler weight stored in bf16 (halves its DMA bytes); compute stays f32.
        "w_pool": (scale * jax.random.normal(ks[2], (H, H), jnp.float32)
                   ).astype(jnp.bfloat16),
        "b_pool": jnp.zeros((1, H), jnp.float32),
        "w1": scale * jax.random.normal(ks[3], (H, MID), jnp.float32),
        "b1": 0.01 * jnp.ones((1, MID), jnp.float32),
        "w2": scale * jax.random.normal(ks[4], (MID, C), jnp.float32),
        "b2": 0.01 * jnp.ones((1, C), jnp.float32),
    }


if __name__ == "__main__":
    key = jax.random.PRNGKey(0)
    k_tok, k_param = jax.random.split(key)

    token_ids = jax.random.randint(k_tok, (B, S), 0, VOCAB, dtype=jnp.int32)
    segment_ids = jnp.zeros((B, S), jnp.int32)
    valid_length = jnp.array([5, 8], jnp.int32)
    params = init_params(k_param)

    logits = bert_classifier_forward(token_ids, valid_length, segment_ids, params)
    logits = jax.block_until_ready(logits)

    ref = reference_forward(token_ids, valid_length, segment_ids, params)
    assert logits.shape == (B, C)
    assert jnp.allclose(logits, ref, atol=1e-5, rtol=1e-5), "mismatch vs reference"

    print("KERNEL_OK")
</pallas_src>

<mosaic_0001>
module attributes {stable_mosaic.version = 11 : i64} {
  func.func @bert_classifier_kernel(%arg0: i32, %arg1: memref<8xi32, #tpu.memory_space<smem>>, %arg2: memref<8x8x128xf32, #tpu.memory_space<vmem>>, %arg3: memref<128x128xbf16, #tpu.memory_space<vmem>>, %arg4: memref<1x128xf32, #tpu.memory_space<vmem>>, %arg5: memref<128x128xf32, #tpu.memory_space<vmem>>, %arg6: memref<1x128xf32, #tpu.memory_space<vmem>>, %arg7: memref<8x128xf32, #tpu.memory_space<vmem>>) attributes {dimension_semantics = [#tpu.dimension_semantics<parallel>], iteration_bounds = array<i64: 1>, scalar_prefetch = 1 : i64, scratch_operands = 0 : i64, tpu.core_type = #tpu.core_type<tc>, window_params = [{transform_indices = @transform_0, window_bounds = array<i64: 8, 8, 128>}, {pipeline_mode = #tpu.pipeline_mode<synchronous>, transform_indices = @transform_1, window_bounds = array<i64: 128, 128>}, {pipeline_mode = #tpu.pipeline_mode<synchronous>, transform_indices = @transform_2, window_bounds = array<i64: 1, 128>}, {pipeline_mode = #tpu.pipeline_mode<synchronous>, transform_indices = @transform_3, window_bounds = array<i64: 128, 128>}, {pipeline_mode = #tpu.pipeline_mode<synchronous>, transform_indices = @transform_4, window_bounds = array<i64: 1, 128>}, {transform_indices = @transform_5, window_bounds = array<i64: 8, 128>}]} {
    %c0 = arith.constant 0 : index
    %c0_0 = arith.constant 0 : index
    %c0_1 = arith.constant 0 : index
    %0 = vector.load %arg2[%c0, %c0_0, %c0_1] : memref<8x8x128xf32, #tpu.memory_space<vmem>>, vector<8x8x128xf32>
    %1 = tpu.iota {dimensions = array<i32: 1>} : vector<1x8xi32>
    %c8_i32 = arith.constant 8 : i32
    %2 = arith.muli %arg0, %c8_i32 : i32
    %c0_i32 = arith.constant 0 : i32
    %3 = arith.addi %2, %c0_i32 : i32
    %4 = arith.index_cast %3 : i32 to index
    %5 = memref.load %arg1[%4] : memref<8xi32, #tpu.memory_space<smem>>
    %c1_i32 = arith.constant 1 : i32
    %6 = arith.maxsi %5, %c1_i32 : i32
    %7 = vector.broadcast %6 : i32 to vector<1x8xi32>
    %8 = arith.cmpi slt, %1, %7 : vector<1x8xi32>
    %9 = arith.extui %8 : vector<1x8xi1> to vector<1x8xi32>
    %10 = arith.sitofp %9 : vector<1x8xi32> to vector<1x8xf32>
    %c8_i32_2 = arith.constant 8 : i32
    %11 = arith.muli %arg0, %c8_i32_2 : i32
    %c1_i32_3 = arith.constant 1 : i32
    %12 = arith.addi %11, %c1_i32_3 : i32
    %13 = arith.index_cast %12 : i32 to index
    %14 = memref.load %arg1[%13] : memref<8xi32, #tpu.memory_space<smem>>
    %c1_i32_4 = arith.constant 1 : i32
    %15 = arith.maxsi %14, %c1_i32_4 : i32
    %16 = vector.broadcast %15 : i32 to vector<1x8xi32>
    %17 = arith.cmpi slt, %1, %16 : vector<1x8xi32>
    %18 = arith.extui %17 : vector<1x8xi1> to vector<1x8xi32>
    %19 = arith.sitofp %18 : vector<1x8xi32> to vector<1x8xf32>
    %c8_i32_5 = arith.constant 8 : i32
    %20 = arith.muli %arg0, %c8_i32_5 : i32
    %c2_i32 = arith.constant 2 : i32
    %21 = arith.addi %20, %c2_i32 : i32
    %22 = arith.index_cast %21 : i32 to index
    %23 = memref.load %arg1[%22] : memref<8xi32, #tpu.memory_space<smem>>
    %c1_i32_6 = arith.constant 1 : i32
    %24 = arith.maxsi %23, %c1_i32_6 : i32
    %25 = vector.broadcast %24 : i32 to vector<1x8xi32>
    %26 = arith.cmpi slt, %1, %25 : vector<1x8xi32>
    %27 = arith.extui %26 : vector<1x8xi1> to vector<1x8xi32>
    %28 = arith.sitofp %27 : vector<1x8xi32> to vector<1x8xf32>
    %c8_i32_7 = arith.constant 8 : i32
    %29 = arith.muli %arg0, %c8_i32_7 : i32
    %c3_i32 = arith.constant 3 : i32
    %30 = arith.addi %29, %c3_i32 : i32
    %31 = arith.index_cast %30 : i32 to index
    %32 = memref.load %arg1[%31] : memref<8xi32, #tpu.memory_space<smem>>
    %c1_i32_8 = arith.constant 1 : i32
    %33 = arith.maxsi %32, %c1_i32_8 : i32
    %34 = vector.broadcast %33 : i32 to vector<1x8xi32>
    %35 = arith.cmpi slt, %1, %34 : vector<1x8xi32>
    %36 = arith.extui %35 : vector<1x8xi1> to vector<1x8xi32>
    %37 = arith.sitofp %36 : vector<1x8xi32> to vector<1x8xf32>
    %c8_i32_9 = arith.constant 8 : i32
    %38 = arith.muli %arg0, %c8_i32_9 : i32
    %c4_i32 = arith.constant 4 : i32
    %39 = arith.addi %38, %c4_i32 : i32
    %40 = arith.index_cast %39 : i32 to index
    %41 = memref.load %arg1[%40] : memref<8xi32, #tpu.memory_space<smem>>
    %c1_i32_10 = arith.constant 1 : i32
    %42 = arith.maxsi %41, %c1_i32_10 : i32
    %43 = vector.broadcast %42 : i32 to vector<1x8xi32>
    %44 = arith.cmpi slt, %1, %43 : vector<1x8xi32>
    %45 = arith.extui %44 : vector<1x8xi1> to vector<1x8xi32>
    %46 = arith.sitofp %45 : vector<1x8xi32> to vector<1x8xf32>
    %c8_i32_11 = arith.constant 8 : i32
    %47 = arith.muli %arg0, %c8_i32_11 : i32
    %c5_i32 = arith.constant 5 : i32
    %48 = arith.addi %47, %c5_i32 : i32
    %49 = arith.index_cast %48 : i32 to index
    %50 = memref.load %arg1[%49] : memref<8xi32, #tpu.memory_space<smem>>
    %c1_i32_12 = arith.constant 1 : i32
    %51 = arith.maxsi %50, %c1_i32_12 : i32
    %52 = vector.broadcast %51 : i32 to vector<1x8xi32>
    %53 = arith.cmpi slt, %1, %52 : vector<1x8xi32>
    %54 = arith.extui %53 : vector<1x8xi1> to vector<1x8xi32>
    %55 = arith.sitofp %54 : vector<1x8xi32> to vector<1x8xf32>
    %c8_i32_13 = arith.constant 8 : i32
    %56 = arith.muli %arg0, %c8_i32_13 : i32
    %c6_i32 = arith.constant 6 : i32
    %57 = arith.addi %56, %c6_i32 : i32
    %58 = arith.index_cast %57 : i32 to index
    %59 = memref.load %arg1[%58] : memref<8xi32, #tpu.memory_space<smem>>
    %c1_i32_14 = arith.constant 1 : i32
    %60 = arith.maxsi %59, %c1_i32_14 : i32
    %61 = vector.broadcast %60 : i32 to vector<1x8xi32>
    %62 = arith.cmpi slt, %1, %61 : vector<1x8xi32>
    %63 = arith.extui %62 : vector<1x8xi1> to vector<1x8xi32>
    %64 = arith.sitofp %63 : vector<1x8xi32> to vector<1x8xf32>
    %c8_i32_15 = arith.constant 8 : i32
    %65 = arith.muli %arg0, %c8_i32_15 : i32
    %c7_i32 = arith.constant 7 : i32
    %66 = arith.addi %65, %c7_i32 : i32
    %67 = arith.index_cast %66 : i32 to index
    %68 = memref.load %arg1[%67] : memref<8xi32, #tpu.memory_space<smem>>
    %c1_i32_16 = arith.constant 1 : i32
    %69 = arith.maxsi %68, %c1_i32_16 : i32
    %70 = vector.broadcast %69 : i32 to vector<1x8xi32>
    %71 = arith.cmpi slt, %1, %70 : vector<1x8xi32>
    %72 = arith.extui %71 : vector<1x8xi1> to vector<1x8xi32>
    %73 = arith.sitofp %72 : vector<1x8xi32> to vector<1x8xf32>
    %74 = tpu.concatenate %10, %19, %28, %37, %46, %55, %64, %73 in 0 : vector<1x8xf32>, vector<1x8xf32>, vector<1x8xf32>, vector<1x8xf32>, vector<1x8xf32>, vector<1x8xf32>, vector<1x8xf32>, vector<1x8xf32> -> vector<8x8xf32>
    %cst = arith.constant dense<0.000000e+00> : vector<8xf32>
    %75 = vector.multi_reduction <add>, %74, %cst [1] : vector<8x8xf32> to vector<8xf32>
    %76 = vector.shape_cast %75 : vector<8xf32> to vector<8x1xf32>
    %77 = tpu.reciprocal %76 : vector<8x1xf32> -> vector<8x1xf32>
    %78 = vector.shape_cast %74 : vector<8x8xf32> to vector<8x8x1xf32>
    %79 = vector.broadcast %78 : vector<8x8x1xf32> to vector<8x8x128xf32>
    %80 = arith.mulf %0, %79 : vector<8x8x128xf32>
    %cst_17 = arith.constant dense<0.000000e+00> : vector<8x128xf32>
    %81 = vector.multi_reduction <add>, %80, %cst_17 [1] : vector<8x8x128xf32> to vector<8x128xf32>
    %82 = vector.broadcast %77 : vector<8x1xf32> to vector<8x128xf32>
    %83 = arith.mulf %81, %82 : vector<8x128xf32>
    %c0_18 = arith.constant 0 : index
    %c0_19 = arith.constant 0 : index
    %84 = vector.load %arg3[%c0_18, %c0_19] : memref<128x128xbf16, #tpu.memory_space<vmem>>, vector<128x128xbf16>
    %85 = arith.extf %84 : vector<128x128xbf16> to vector<128x128xf32>
    %cst_20 = arith.constant dense<0.000000e+00> : vector<8x128xf32>
    %86 = tpu.matmul %83, %85, %cst_20 {dimension_numbers = #tpu.dot_dimension_numbers<[1], [0], [0], [1], [0, 0, 1, 1], [], []>} : vector<8x128xf32>, vector<128x128xf32>, vector<8x128xf32> -> vector<8x128xf32>
    %c0_21 = arith.constant 0 : index
    %c0_22 = arith.constant 0 : index
    %87 = vector.load %arg4[%c0_21, %c0_22] : memref<1x128xf32, #tpu.memory_space<vmem>>, vector<1x128xf32>
    %88 = vector.broadcast %87 : vector<1x128xf32> to vector<8x128xf32>
    %89 = arith.addf %86, %88 : vector<8x128xf32>
    %90 = math.tanh %89 : vector<8x128xf32>
    %c0_23 = arith.constant 0 : index
    %c0_24 = arith.constant 0 : index
    %91 = vector.load %arg5[%c0_23, %c0_24] : memref<128x128xf32, #tpu.memory_space<vmem>>, vector<128x128xf32>
    %cst_25 = arith.constant dense<0.000000e+00> : vector<8x128xf32>
    %92 = tpu.matmul %90, %91, %cst_25 {dimension_numbers = #tpu.dot_dimension_numbers<[1], [0], [0], [1], [0, 0, 1, 1], [], []>} : vector<8x128xf32>, vector<128x128xf32>, vector<8x128xf32> -> vector<8x128xf32>
    %c0_26 = arith.constant 0 : index
    %c0_27 = arith.constant 0 : index
    %93 = vector.load %arg6[%c0_26, %c0_27] : memref<1x128xf32, #tpu.memory_space<vmem>>, vector<1x128xf32>
    %94 = vector.broadcast %93 : vector<1x128xf32> to vector<8x128xf32>
    %95 = arith.addf %92, %94 : vector<8x128xf32>
    %c0_28 = arith.constant 0 : index
    %c0_29 = arith.constant 0 : index
    %96 = vector.load %arg7[%c0_28, %c0_29] : memref<8x128xf32, #tpu.memory_space<vmem>>, vector<8x128xf32>
    tpu.vector_store %arg7[%c0_28, %c0_29], %95 {strides = array<i32>} : memref<8x128xf32, #tpu.memory_space<vmem>>, vector<8x128xf32>,
    return
  }
  func.func @transform_0(%arg0: i32, %arg1: memref<8xi32, #tpu.memory_space<smem>>) -> (i32, i32, i32) {
    %c0_i32 = arith.constant 0 : i32
    %c0_i32_0 = arith.constant 0 : i32
    %c0_i32_1 = arith.constant 0 : i32
    return %arg0, %c0_i32, %c0_i32_0 : i32, i32, i32
  }
  func.func @transform_1(%arg0: i32, %arg1: memref<8xi32, #tpu.memory_space<smem>>) -> (i32, i32) {
    %c0_i32 = arith.constant 0 : i32
    %c0_i32_0 = arith.constant 0 : i32
    %c0_i32_1 = arith.constant 0 : i32
    return %c0_i32, %c0_i32_0 : i32, i32
  }
  func.func @transform_2(%arg0: i32, %arg1: memref<8xi32, #tpu.memory_space<smem>>) -> (i32, i32) {
    %c0_i32 = arith.constant 0 : i32
    %c0_i32_0 = arith.constant 0 : i32
    %c0_i32_1 = arith.constant 0 : i32
    return %c0_i32, %c0_i32_0 : i32, i32
  }
  func.func @transform_3(%arg0: i32, %arg1: memref<8xi32, #tpu.memory_space<smem>>) -> (i32, i32) {
    %c0_i32 = arith.constant 0 : i32
    %c0_i32_0 = arith.constant 0 : i32
    %c0_i32_1 = arith.constant 0 : i32
    return %c0_i32, %c0_i32_0 : i32, i32
  }
  func.func @transform_4(%arg0: i32, %arg1: memref<8xi32, #tpu.memory_space<smem>>) -> (i32, i32) {
    %c0_i32 = arith.constant 0 : i32
    %c0_i32_0 = arith.constant 0 : i32
    %c0_i32_1 = arith.constant 0 : i32
    return %c0_i32, %c0_i32_0 : i32, i32
  }
  func.func @transform_5(%arg0: i32, %arg1: memref<8xi32, #tpu.memory_space<smem>>) -> (i32, i32) {
    %c0_i32 = arith.constant 0 : i32
    %c0_i32_0 = arith.constant 0 : i32
    return %arg0, %c0_i32 : i32, i32
  }
}

</mosaic_0001>

<llo_original>
// kernel: tpu_custom_call.1
$region0: #{tpu_custom_call.1}
  #allocation0 [shape = 'u32[]', space=smem, size = 0x4, offset = 0x4, fixed_abs, tag = 'smem constant byte address 0x4 - core index']
  #allocation1 [shape = 'u32[144,128]{1,0:T(1,128)}', space=vmem, size = 0x12000, scoped, tag = 'internal scratch']
  #allocation2 [shape = 's32[1]{0}', space=sflag, size = 0x4, scoped, tag = 'scoped memory for tpu_custom_call.1']
  #allocation3 [shape = 'u8[512]{0}', space=smem, size = 0x200, scoped, tag = 'prefetched SMEM operand 0']
  %s0 = inlined_call_operand.hbm [shape: s32[8], index: 0, kind: input, shape index: {}]
  %s1 = inlined_call_operand.hbm [shape: f32[8,8,128], index: 1, kind: input, shape index: {}]
  %s2 = inlined_call_operand.hbm [shape: bf16[128,128], index: 2, kind: input, shape index: {}]
  %s3 = inlined_call_operand.vmem [shape: f32[1,128], index: 3, kind: input, shape index: {}]
  %s4 = inlined_call_operand.hbm [shape: f32[128,128], index: 4, kind: input, shape index: {}]
  %s5 = inlined_call_operand.vmem [shape: f32[1,128], index: 5, kind: input, shape index: {}]
  %s6 = inlined_call_operand.hbm [shape: f32[8,128], index: 6, kind: output, shape index: {}]
  %s7 = sld [smem:[#allocation0]]
  $region42: #{tpu_custom_call.1} parent=0
    _
  %s9 = ssub.s32 1, %s7
  %s10 = scalar_select 0, %s9, %s7
  %12 = dma.hbm_to_smem %s0, 16, [#allocation3], [#allocation2]
  %13 = dma.done [#allocation2], 16
  %14 = sfence
  $region1: #{tpu_custom_call.1} parent=0
    #allocation4 [shape = 'u8[32768]{0}', space=vmem, size = 0x8000, scoped, tag = 'input window, operand 1, single buffered']
    #allocation5 [shape = 's32[1]{0}', space=sflag, size = 0x4, scoped, tag = 'scoped memory for tpu_custom_call.1']
    #allocation6 [shape = 's32[1]{0}', space=sflag, size = 0x4, scoped, tag = 'scoped memory for tpu_custom_call.1']
    #allocation7 [shape = 'u8[32768]{0}', space=vmem, size = 0x8000, scoped, tag = 'input window, operand 2, single buffered']
    #allocation8 [shape = 's32[1]{0}', space=sflag, size = 0x4, scoped, tag = 'scoped memory for tpu_custom_call.1']
    #allocation9 [shape = 'u8[65536]{0}', space=vmem, size = 0x10000, scoped, tag = 'input window, operand 4, single buffered']
    #allocation10 [shape = 'u8[4096]{0}', space=vmem, size = 0x1000, scoped, tag = 'output window, operand 0, single buffered']
    %15 = vsyncpa [#allocation5], 0
    %16 = vsyncpa [#allocation8], 0
    %17 = vsyncpa [#allocation6], 0
    // Predicated region
    $region2: #{tpu_custom_call.1} parent=1 // pred_check
      _
    $region3: #{tpu_custom_call.1} parent=1 // pred_check_branch
      %19 = sbr.rel (0) target = $region5
    $region4: #{tpu_custom_call.1} parent=1 // pred_region
      %s21 = ssub.s32 1024, 1024
      %22 = vsyncadd [#allocation5], %s21
      %s23 = sshll.u32 [#allocation4], 4
      %s24 = int_to_ptr.vmem [resolvable:$true] %s23
      %29 = dma.hbm_to_vmem [thread:$0]  %s1, 1024, %s24, [#allocation5], 128, 128, 8
    $region5: #{tpu_custom_call.1} parent=1 // pred_fallthru
      _
    // Predicated region
    $region6: #{tpu_custom_call.1} parent=1 // pred_check
      _
    $region7: #{tpu_custom_call.1} parent=1 // pred_check_branch
      %31 = sbr.rel (0) target = $region9
    $region8: #{tpu_custom_call.1} parent=1 // pred_region
      %s33 = ssub.s32 1024, 1024
      %34 = vsyncadd [#allocation8], %s33
      %s35 = sshll.u32 [#allocation7], 4
      %s36 = int_to_ptr.vmem [resolvable:$true] %s35
      %41 = dma.hbm_to_vmem [thread:$0]  %s2, 1024, %s36, [#allocation8], 64, 64, 4
    $region9: #{tpu_custom_call.1} parent=1 // pred_fallthru
      _
    // Predicated region
    $region10: #{tpu_custom_call.1} parent=1 // pred_check
      _
    $region11: #{tpu_custom_call.1} parent=1 // pred_check_branch
      %43 = sbr.rel (0) target = $region13
    $region12: #{tpu_custom_call.1} parent=1 // pred_region
      _
    $region13: #{tpu_custom_call.1} parent=1 // pred_fallthru
      _
    // Predicated region
    $region14: #{tpu_custom_call.1} parent=1 // pred_check
      _
    $region15: #{tpu_custom_call.1} parent=1 // pred_check_branch
      %45 = sbr.rel (0) target = $region17
    $region16: #{tpu_custom_call.1} parent=1 // pred_region
      %s47 = ssub.s32 2048, 2048
      %48 = vsyncadd [#allocation8], %s47
      %s49 = sshll.u32 [#allocation9], 4
      %s50 = int_to_ptr.vmem [resolvable:$true] %s49
      %55 = dma.hbm_to_vmem [thread:$0]  %s4, 2048, %s50, [#allocation8], 128, 128, 8
    $region17: #{tpu_custom_call.1} parent=1 // pred_fallthru
      _
    // Predicated region
    $region18: #{tpu_custom_call.1} parent=1 // pred_check
      _
    $region19: #{tpu_custom_call.1} parent=1 // pred_check_branch
      %57 = sbr.rel (0) target = $region21
    $region20: #{tpu_custom_call.1} parent=1 // pred_region
      _
    $region21: #{tpu_custom_call.1} parent=1 // pred_fallthru
      _
    // Predicated region
    $region22: #{tpu_custom_call.1} parent=1 // pred_check
      _
    $region23: #{tpu_custom_call.1} parent=1 // pred_check_branch
      %59 = sbr.rel (0) target = $region25
    $region24: #{tpu_custom_call.1} parent=1 // pred_region
      %60 = dma.done [#allocation5], 1024
    $region25: #{tpu_custom_call.1} parent=1 // pred_fallthru
      _
    // Predicated region
    $region26: #{tpu_custom_call.1} parent=1 // pred_check
      _
    $region27: #{tpu_custom_call.1} parent=1 // pred_check_branch
      %62 = sbr.rel (0) target = $region29
    $region28: #{tpu_custom_call.1} parent=1 // pred_region
      %63 = dma.done [#allocation8], 1024
    $region29: #{tpu_custom_call.1} parent=1 // pred_fallthru
      _
    // Predicated region
    $region30: #{tpu_custom_call.1} parent=1 // pred_check
      _
    $region31: #{tpu_custom_call.1} parent=1 // pred_check_branch
      %65 = sbr.rel (0) target = $region33
    $region32: #{tpu_custom_call.1} parent=1 // pred_region
      %66 = dma.done [#allocation8], 2048
    $region33: #{tpu_custom_call.1} parent=1 // pred_fallthru
      _
    %v67 = vld [vmem:[#allocation4] sm:$0xff]
    %v68 = vld [vmem:[#allocation4 + $0x8] sm:$0xff]
    %v69 = vld [vmem:[#allocation4 + $0x10] sm:$0xff]
    %v70 = vld [vmem:[#allocation4 + $0x18] sm:$0xff]
    %v71 = vld [vmem:[#allocation4 + $0x20] sm:$0xff]
    %v72 = vld [vmem:[#allocation4 + $0x28] sm:$0xff]
    %v73 = vld [vmem:[#allocation4 + $0x30] sm:$0xff]
    %v74 = vld [vmem:[#allocation4 + $0x38] sm:$0xff]
    %v75 = vlaneseq
    %v76 = vand.u32 %v75, 127
    %s77 = smul.u32 0, 8
    %s78 = sld [smem:[#allocation3 + %s77]]
    %p79 = scmp.gt.s32.totalorder %s78, 1
    %s80 = scalar_select %p79, %s78, 1
    %v81 = vstv %s80
    %vm82 = vcmp.lt.s32.totalorder %v76, %v81
    %v83 = vsel %vm82, 1, 0
    %v84 = vcvt.s32.f32 %v83
    %s85 = sadd.s32 %s77, 1
    %s86 = sld [smem:[#allocation3 + %s85]]
    %p87 = scmp.gt.s32.totalorder %s86, 1
    %s88 = scalar_select %p87, %s86, 1
    %v89 = vstv %s88
    %vm90 = vcmp.lt.s32.totalorder %v76, %v89
    %v91 = vsel %vm90, 1, 0
    %v92 = vcvt.s32.f32 %v91
    %s93 = sadd.s32 %s77, 2
    %s94 = sld [smem:[#allocation3 + %s93]]
    %p95 = scmp.gt.s32.totalorder %s94, 1
    %s96 = scalar_select %p95, %s94, 1
    %v97 = vstv %s96
    %vm98 = vcmp.lt.s32.totalorder %v76, %v97
    %v99 = vsel %vm98, 1, 0
    %v100 = vcvt.s32.f32 %v99
    %s101 = sadd.s32 %s77, 3
    %s102 = sld [smem:[#allocation3 + %s101]]
    %p103 = scmp.gt.s32.totalorder %s102, 1
    %s104 = scalar_select %p103, %s102, 1
    %v105 = vstv %s104
    %vm106 = vcmp.lt.s32.totalorder %v76, %v105
    %v107 = vsel %vm106, 1, 0
    %v108 = vcvt.s32.f32 %v107
    %s109 = sadd.s32 %s77, 4
    %s110 = sld [smem:[#allocation3 + %s109]]
    %p111 = scmp.gt.s32.totalorder %s110, 1
    %s112 = scalar_select %p111, %s110, 1
    %v113 = vstv %s112
    %vm114 = vcmp.lt.s32.totalorder %v76, %v113
    %v115 = vsel %vm114, 1, 0
    %v116 = vcvt.s32.f32 %v115
    %s117 = sadd.s32 %s77, 5
    %s118 = sld [smem:[#allocation3 + %s117]]
    %p119 = scmp.gt.s32.totalorder %s118, 1
    %s120 = scalar_select %p119, %s118, 1
    %v121 = vstv %s120
    %vm122 = vcmp.lt.s32.totalorder %v76, %v121
    %v123 = vsel %vm122, 1, 0
    %v124 = vcvt.s32.f32 %v123
    %s125 = sadd.s32 %s77, 6
    %s126 = sld [smem:[#allocation3 + %s125]]
    %p127 = scmp.gt.s32.totalorder %s126, 1
    %s128 = scalar_select %p127, %s126, 1
    %v129 = vstv %s128
    %vm130 = vcmp.lt.s32.totalorder %v76, %v129
    %v131 = vsel %vm130, 1, 0
    %v132 = vcvt.s32.f32 %v131
    %s133 = sadd.s32 %s77, 7
    %s134 = sld [smem:[#allocation3 + %s133]]
    %p135 = scmp.gt.s32.totalorder %s134, 1
    %s136 = scalar_select %p135, %s134, 1
    %v137 = vstv %s136
    %vm138 = vcmp.lt.s32.totalorder %v76, %v137
    %v139 = vsel %vm138, 1, 0
    %v140 = vcvt.s32.f32 %v139
    %vm141 = vcmask 1040384
    %v142 = vsel %vm141, %v84, %v92
    %vm143 = vcmask 1041408
    %v144 = vsel %vm143, %v142, %v100
    %vm145 = vcmask 1042432
    %v146 = vsel %vm145, %v144, %v108
    %vm147 = vcmask 1043456
    %v148 = vsel %vm147, %v146, %v116
    %vm149 = vcmask 1044480
    %v150 = vsel %vm149, %v148, %v124
    %vm151 = vcmask 1045504
    %v152 = vsel %vm151, %v150, %v132
    %vm153 = vcmask 1046528
    %v154 = vsel %vm153, %v152, %v140
    %vm155 = vcmask 64512
    %v156 = vsel %vm155, %v154, 0.0
    %157 = vadd.xlane.f32.xlu0 %v156
    %v158 = vpop.xlane.xlu0 %157
    %v159 = vrcp.pop %v158
    %v160 = vlaneseq
    %v161 = vshrl.u32 %v160, 7
    %v162 = vsub.s32 0, %v161
    %v163 = vrot.slane %v154, %v162
    %165 = vbcast.lane.b32.xlu0 %v163, 256
    %v166 = vpop.permute.xlu0 %165
    %v167 = vlaneseq
    %v168 = vshrl.u32 %v167, 7
    %v169 = vsub.s32 1, %v168
    %v170 = vrot.slane %v154, %v169
    %172 = vbcast.lane.b32.xlu0 %v170, 256
    %v173 = vpop.permute.xlu0 %172
    %v174 = vlaneseq
    %v175 = vshrl.u32 %v174, 7
    %v176 = vsub.s32 2, %v175
    %v177 = vrot.slane %v154, %v176
    %179 = vbcast.lane.b32.xlu0 %v177, 256
    %v180 = vpop.permute.xlu0 %179
    %v181 = vlaneseq
    %v182 = vshrl.u32 %v181, 7
    %v183 = vsub.s32 3, %v182
    %v184 = vrot.slane %v154, %v183
    %186 = vbcast.lane.b32.xlu0 %v184, 256
    %v187 = vpop.permute.xlu0 %186
    %v188 = vlaneseq
    %v189 = vshrl.u32 %v188, 7
    %v190 = vsub.s32 4, %v189
    %v191 = vrot.slane %v154, %v190
    %193 = vbcast.lane.b32.xlu0 %v191, 256
    %v194 = vpop.permute.xlu0 %193
    %v195 = vlaneseq
    %v196 = vshrl.u32 %v195, 7
    %v197 = vsub.s32 5, %v196
    %v198 = vrot.slane %v154, %v197
    %200 = vbcast.lane.b32.xlu0 %v198, 256
    %v201 = vpop.permute.xlu0 %200
    %v202 = vlaneseq
    %v203 = vshrl.u32 %v202, 7
    %v204 = vsub.s32 6, %v203
    %v205 = vrot.slane %v154, %v204
    %207 = vbcast.lane.b32.xlu0 %v205, 256
    %v208 = vpop.permute.xlu0 %207
    %v209 = vlaneseq
    %v210 = vshrl.u32 %v209, 7
    %v211 = vsub.s32 7, %v210
    %v212 = vrot.slane %v154, %v211
    %214 = vbcast.lane.b32.xlu0 %v212, 256
    %v215 = vpop.permute.xlu0 %214
    %v216 = vmul.f32 %v67, %v166
    %v217 = vmul.f32 %v68, %v173
    %v218 = vmul.f32 %v69, %v180
    %v219 = vmul.f32 %v70, %v187
    %v220 = vmul.f32 %v71, %v194
    %v221 = vmul.f32 %v72, %v201
    %v222 = vmul.f32 %v73, %v208
    %v223 = vmul.f32 %v74, %v215
    %v224 = vrot.slane %v216, 4
    %v225 = vadd.f32 %v216, %v224
    %v226 = vrot.slane %v225, 2
    %v227 = vadd.f32 %v225, %v226
    %v228 = vrot.slane %v227, 1
    %v229 = vadd.f32 %v227, %v228
    %v230 = vrot.slane %v217, 4
    %v231 = vadd.f32 %v217, %v230
    %v232 = vrot.slane %v231, 2
    %v233 = vadd.f32 %v231, %v232
    %v234 = vrot.slane %v233, 1
    %v235 = vadd.f32 %v233, %v234
    %v236 = vrot.slane %v218, 4
    %v237 = vadd.f32 %v218, %v236
    %v238 = vrot.slane %v237, 2
    %v239 = vadd.f32 %v237, %v238
    %v240 = vrot.slane %v239, 1
    %v241 = vadd.f32 %v239, %v240
    %v242 = vrot.slane %v219, 4
    %v243 = vadd.f32 %v219, %v242
    %v244 = vrot.slane %v243, 2
    %v245 = vadd.f32 %v243, %v244
    %v246 = vrot.slane %v245, 1
    %v247 = vadd.f32 %v245, %v246
    %v248 = vrot.slane %v220, 4
    %v249 = vadd.f32 %v220, %v248
    %v250 = vrot.slane %v249, 2
    %v251 = vadd.f32 %v249, %v250
    %v252 = vrot.slane %v251, 1
    %v253 = vadd.f32 %v251, %v252
    %v254 = vrot.slane %v221, 4
    %v255 = vadd.f32 %v221, %v254
    %v256 = vrot.slane %v255, 2
    %v257 = vadd.f32 %v255, %v256
    %v258 = vrot.slane %v257, 1
    %v259 = vadd.f32 %v257, %v258
    %v260 = vrot.slane %v222, 4
    %v261 = vadd.f32 %v222, %v260
    %v262 = vrot.slane %v261, 2
    %v263 = vadd.f32 %v261, %v262
    %v264 = vrot.slane %v263, 1
    %v265 = vadd.f32 %v263, %v264
    %v266 = vrot.slane %v223, 4
    %v267 = vadd.f32 %v223, %v266
    %v268 = vrot.slane %v267, 2
    %v269 = vadd.f32 %v267, %v268
    %v270 = vrot.slane %v269, 1
    %v271 = vadd.f32 %v269, %v270
    %v273 = vrot.slane %v159, 1
    %v274 = vrot.slane %v159, 2
    %v275 = vrot.slane %v159, 3
    %v276 = vrot.slane %v159, 4
    %v277 = vrot.slane %v159, 5
    %v278 = vrot.slane %v159, 6
    %v279 = vrot.slane %v159, 7
    %v288 = vmul.f32 %v229, %v159
    %v289 = vmul.f32 %v235, %v273
    %v290 = vmul.f32 %v241, %v274
    %v291 = vmul.f32 %v247, %v275
    %v292 = vmul.f32 %v253, %v276
    %v293 = vmul.f32 %v259, %v277
    %v294 = vmul.f32 %v265, %v278
    %v295 = vmul.f32 %v271, %v279
    %v296 = vld [vmem:[#allocation7] sm:$0xf]
    %v297 = vld [vmem:[#allocation7 + $0x4] sm:$0xf]
    %v298 = vld [vmem:[#allocation7 + $0x8] sm:$0xf]
    %v299 = vld [vmem:[#allocation7 + $0xc] sm:$0xf]
    %v300 = vld [vmem:[#allocation7 + $0x10] sm:$0xf]
    %v301 = vld [vmem:[#allocation7 + $0x14] sm:$0xf]
    %v302 = vld [vmem:[#allocation7 + $0x18] sm:$0xf]
    %v303 = vld [vmem:[#allocation7 + $0x1c] sm:$0xf]
    %v304 = vld [vmem:[#allocation7 + $0x20] sm:$0xf]
    %v305 = vld [vmem:[#allocation7 + $0x24] sm:$0xf]
    %v306 = vld [vmem:[#allocation7 + $0x28] sm:$0xf]
    %v307 = vld [vmem:[#allocation7 + $0x2c] sm:$0xf]
    %v308 = vld [vmem:[#allocation7 + $0x30] sm:$0xf]
    %v309 = vld [vmem:[#allocation7 + $0x34] sm:$0xf]
    %v310 = vld [vmem:[#allocation7 + $0x38] sm:$0xf]
    %v311 = vld [vmem:[#allocation7 + $0x3c] sm:$0xf]
    %v312 = vunpack.c.l.bf16 %v296
    %v313 = vunpack.c.l.bf16 %v297
    %v314 = vunpack.c.l.bf16 %v298
    %v315 = vunpack.c.l.bf16 %v299
    %v316 = vunpack.c.l.bf16 %v300
    %v317 = vunpack.c.l.bf16 %v301
    %v318 = vunpack.c.l.bf16 %v302
    %v319 = vunpack.c.l.bf16 %v303
    %v320 = vunpack.c.l.bf16 %v304
    %v321 = vunpack.c.l.bf16 %v305
    %v322 = vunpack.c.l.bf16 %v306
    %v323 = vunpack.c.l.bf16 %v307
    %v324 = vunpack.c.l.bf16 %v308
    %v325 = vunpack.c.l.bf16 %v309
    %v326 = vunpack.c.l.bf16 %v310
    %v327 = vunpack.c.l.bf16 %v311
    %v328 = vld [vmem:[%s3] sm:$0x1]
    %v330 = vlaneseq
    %v331 = vshrl.u32 %v330, 7
    %v332 = vsub.s32 0, %v331
    %v333 = vrot.slane %v328, %v332
    %v343 = vrot.slane %v289, 7
    %vm344 = vcmask 1041409
    %v345 = vsel %vm344, %v343, %v288
    %v346 = vrot.slane %v290, 6
    %vm347 = vcmask 1042434
    %v348 = vsel %vm347, %v346, %v345
    %v349 = vrot.slane %v291, 5
    %vm350 = vcmask 1043459
    %v351 = vsel %vm350, %v349, %v348
    %v352 = vrot.slane %v292, 4
    %vm353 = vcmask 1044484
    %v354 = vsel %vm353, %v352, %v351
    %v355 = vrot.slane %v293, 3
    %vm356 = vcmask 1045509
    %v357 = vsel %vm356, %v355, %v354
    %v358 = vrot.slane %v294, 2
    %vm359 = vcmask 1046534
    %v360 = vsel %vm359, %v358, %v357
    %v361 = vrot.slane %v295, 1
    %vm362 = vcmask 1047559
    %v363 = vsel %vm362, %v361, %v360
    %365 = vmatprep.subr.mxu0 0.0
    %366 = vmatpush1.msra.mxu0 %v312
    %367 = vmatprep.subr.mxu0 0.0
    %368 = vmatpush1.msra.mxu0 %v313
    %369 = vmatprep.subr.mxu0 0.0
    %370 = vmatpush1.msra.mxu0 %v314
    %371 = vmatprep.subr.mxu0 0.0
    %372 = vmatpush1.msra.mxu0 %v315
    %373 = vmatprep.subr.mxu0 0.0
    %374 = vmatpush1.msra.mxu0 %v316
    %375 = vmatprep.subr.mxu0 0.0
    %376 = vmatpush1.msra.mxu0 %v317
    %377 = vmatprep.subr.mxu0 0.0
    %378 = vmatpush1.msra.mxu0 %v318
    %379 = vmatprep.subr.mxu0 0.0
    %380 = vmatpush1.msra.mxu0 %v319
    %381 = vmatprep.subr.mxu0 0.0
    %382 = vmatpush1.msra.mxu0 %v320
    %383 = vmatprep.subr.mxu0 0.0
    %384 = vmatpush1.msra.mxu0 %v321
    %385 = vmatprep.subr.mxu0 0.0
    %386 = vmatpush1.msra.mxu0 %v322
    %387 = vmatprep.subr.mxu0 0.0
    %388 = vmatpush1.msra.mxu0 %v323
    %389 = vmatprep.subr.mxu0 0.0
    %390 = vmatpush1.msra.mxu0 %v324
    %391 = vmatprep.subr.mxu0 0.0
    %392 = vmatpush1.msra.mxu0 %v325
    %393 = vmatprep.subr.mxu0 0.0
    %394 = vmatpush1.msra.mxu0 %v326
    %395 = vmatprep.subr.mxu0 0.0
    %396 = vmatpush1.msra.mxu0 %v327
    %397 = vmatprep.subr.mxu0 0.0
    %398 = vmatpush1.msra.mxu0 0.0
    %399 = vmatprep.subr.mxu0 0.0
    %400 = vmatpush1.msra.mxu0 0.0
    %401 = vmatprep.subr.mxu0 0.0
    %402 = vmatpush1.msra.mxu0 0.0
    %403 = vmatprep.subr.mxu0 0.0
    %404 = vmatpush1.msra.mxu0 0.0
    %405 = vmatprep.subr.mxu0 0.0
    %406 = vmatpush1.msra.mxu0 0.0
    %407 = vmatprep.subr.mxu0 0.0
    %408 = vmatpush1.msra.mxu0 0.0
    %409 = vmatprep.subr.mxu0 0.0
    %410 = vmatpush1.msra.mxu0 0.0
    %411 = vmatprep.subr.mxu0 0.0
    %412 = vmatpush1.msra.mxu0 0.0
    %413 = vmatprep.subr.mxu0 0.0
    %414 = vmatpush1.msra.mxu0 0.0
    %415 = vmatprep.subr.mxu0 0.0
    %416 = vmatpush1.msra.mxu0 0.0
    %417 = vmatprep.subr.mxu0 0.0
    %418 = vmatpush1.msra.mxu0 0.0
    %419 = vmatprep.subr.mxu0 0.0
    %420 = vmatpush1.msra.mxu0 0.0
    %421 = vmatprep.subr.mxu0 0.0
    %422 = vmatpush1.msra.mxu0 0.0
    %423 = vmatprep.subr.mxu0 0.0
    %424 = vmatpush1.msra.mxu0 0.0
    %425 = vmatprep.subr.mxu0 0.0
    %426 = vmatpush1.msra.mxu0 0.0
    %427 = vmatprep.subr.mxu0 0.0
    %428 = vmatpush1.msra.mxu0 0.0
    %429 = vmatprep.mubr.f32.mxu0 0.0
    %430 = vmatmul.mubr.f32.gmra.mrb[0].mxu0 %v363
    %v431 = vpop.f32.mrb[0].mxu0
    %v432 = vadd.f32 %v333, %v431
    %v433 = vpop.f32.mrb[0].mxu0
    %434 = vdwg.mxu0
    %v435 = vtanh.pop %v432
    %v436 = vld [vmem:[#allocation9] sm:$0xff]
    %v437 = vld [vmem:[#allocation9 + $0x8] sm:$0xff]
    %v438 = vld [vmem:[#allocation9 + $0x10] sm:$0xff]
    %v439 = vld [vmem:[#allocation9 + $0x18] sm:$0xff]
    %v440 = vld [vmem:[#allocation9 + $0x20] sm:$0xff]
    %v441 = vld [vmem:[#allocation9 + $0x28] sm:$0xff]
    %v442 = vld [vmem:[#allocation9 + $0x30] sm:$0xff]
    %v443 = vld [vmem:[#allocation9 + $0x38] sm:$0xff]
    %v444 = vld [vmem:[#allocation9 + $0x40] sm:$0xff]
    %v445 = vld [vmem:[#allocation9 + $0x48] sm:$0xff]
    %v446 = vld [vmem:[#allocation9 + $0x50] sm:$0xff]
    %v447 = vld [vmem:[#allocation9 + $0x58] sm:$0xff]
    %v448 = vld [vmem:[#allocation9 + $0x60] sm:$0xff]
    %v449 = vld [vmem:[#allocation9 + $0x68] sm:$0xff]
    %v450 = vld [vmem:[#allocation9 + $0x70] sm:$0xff]
    %v451 = vld [vmem:[#allocation9 + $0x78] sm:$0xff]
    %v452 = vld [vmem:[%s5] sm:$0x1]
    %v454 = vlaneseq
    %v455 = vshrl.u32 %v454, 7
    %v456 = vsub.s32 0, %v455
    %v457 = vrot.slane %v452, %v456
    %459 = vmatprep.subr.mxu0 0.0
    %460 = vmatpush1.msra.mxu0 %v436
    %461 = vmatprep.subr.mxu0 0.0
    %462 = vmatpush1.msra.mxu0 %v437
    %463 = vmatprep.subr.mxu0 0.0
    %464 = vmatpush1.msra.mxu0 %v438
    %465 = vmatprep.subr.mxu0 0.0
    %466 = vmatpush1.msra.mxu0 %v439
    %467 = vmatprep.subr.mxu0 0.0
    %468 = vmatpush1.msra.mxu0 %v440
    %469 = vmatprep.subr.mxu0 0.0
    %470 = vmatpush1.msra.mxu0 %v441
    %471 = vmatprep.subr.mxu0 0.0
    %472 = vmatpush1.msra.mxu0 %v442
    %473 = vmatprep.subr.mxu0 0.0
    %474 = vmatpush1.msra.mxu0 %v443
    %475 = vmatprep.subr.mxu0 0.0
    %476 = vmatpush1.msra.mxu0 %v444
    %477 = vmatprep.subr.mxu0 0.0
    %478 = vmatpush1.msra.mxu0 %v445
    %479 = vmatprep.subr.mxu0 0.0
    %480 = vmatpush1.msra.mxu0 %v446
    %481 = vmatprep.subr.mxu0 0.0
    %482 = vmatpush1.msra.mxu0 %v447
    %483 = vmatprep.subr.mxu0 0.0
    %484 = vmatpush1.msra.mxu0 %v448
    %485 = vmatprep.subr.mxu0 0.0
    %486 = vmatpush1.msra.mxu0 %v449
    %487 = vmatprep.subr.mxu0 0.0
    %488 = vmatpush1.msra.mxu0 %v450
    %489 = vmatprep.subr.mxu0 0.0
    %490 = vmatpush1.msra.mxu0 %v451
    %491 = vmatprep.subr.mxu0 0.0
    %492 = vmatpush1.msra.mxu0 0.0
    %493 = vmatprep.subr.mxu0 0.0
    %494 = vmatpush1.msra.mxu0 0.0
    %495 = vmatprep.subr.mxu0 0.0
    %496 = vmatpush1.msra.mxu0 0.0
    %497 = vmatprep.subr.mxu0 0.0
    %498 = vmatpush1.msra.mxu0 0.0
    %499 = vmatprep.subr.mxu0 0.0
    %500 = vmatpush1.msra.mxu0 0.0
    %501 = vmatprep.subr.mxu0 0.0
    %502 = vmatpush1.msra.mxu0 0.0
    %503 = vmatprep.subr.mxu0 0.0
    %504 = vmatpush1.msra.mxu0 0.0
    %505 = vmatprep.subr.mxu0 0.0
    %506 = vmatpush1.msra.mxu0 0.0
    %507 = vmatprep.subr.mxu0 0.0
    %508 = vmatpush1.msra.mxu0 0.0
    %509 = vmatprep.subr.mxu0 0.0
    %510 = vmatpush1.msra.mxu0 0.0
    %511 = vmatprep.subr.mxu0 0.0
    %512 = vmatpush1.msra.mxu0 0.0
    %513 = vmatprep.subr.mxu0 0.0
    %514 = vmatpush1.msra.mxu0 0.0
    %515 = vmatprep.subr.mxu0 0.0
    %516 = vmatpush1.msra.mxu0 0.0
    %517 = vmatprep.subr.mxu0 0.0
    %518 = vmatpush1.msra.mxu0 0.0
    %519 = vmatprep.subr.mxu0 0.0
    %520 = vmatpush1.msra.mxu0 0.0
    %521 = vmatprep.subr.mxu0 0.0
    %522 = vmatpush1.msra.mxu0 0.0
    %523 = vmatprep.mubr.f32.mxu0 0.0
    %524 = vmatmul.mubr.f32.gmra.mrb[0].mxu0 %v435
    %v525 = vpop.f32.mrb[0].mxu0
    %v526 = vadd.f32 %v457, %v525
    %v527 = vpop.f32.mrb[0].mxu0
    %528 = vdwg.mxu0
    %529 = vst [vmem:[#allocation10] sm:$0xff] %v526
    // Predicated region
    $region34: #{tpu_custom_call.1} parent=1 // pred_check
      _
    $region35: #{tpu_custom_call.1} parent=1 // pred_check_branch
      %531 = sbr.rel (0) target = $region37
    $region36: #{tpu_custom_call.1} parent=1 // pred_region
      %s533 = ssub.s32 128, 128
      %534 = vsyncadd [#allocation6], %s533
      %s536 = sshll.u32 [#allocation10], 4
      %s537 = int_to_ptr.vmem [resolvable:$true] %s536
      %539 = dma.vmem_to_hbm [thread:$0]  %s537, 128, %s6, [#allocation6]
    $region37: #{tpu_custom_call.1} parent=1 // pred_fallthru
      _
    // Predicated region
    $region38: #{tpu_custom_call.1} parent=1 // pred_check
      _
    $region39: #{tpu_custom_call.1} parent=1 // pred_check_branch
      %541 = sbr.rel (0) target = $region41
    $region40: #{tpu_custom_call.1} parent=1 // pred_region
      %542 = dma.done [#allocation6], 128
    $region41: #{tpu_custom_call.1} parent=1 // pred_fallthru
      _
    %543 = vsyncpa [#allocation5], 1
    %544 = vsyncpa [#allocation8], 1
    %545 = vsyncpa [#allocation6], 1

</llo_original>
